<compile_context>
chip_gen: v7x
topology: tpu7x:2x2x1
jax: 0.10.0
libtpu: 0.0.40
codegen_flags: <defaults>
</compile_context>

<pallas_src>
import functools

import jax
import jax.numpy as jnp
from jax.experimental import pallas as pl
from jax.experimental.pallas import tpu as pltpu


def _round_up(x, m):
    return -(-x // m) * m


def _basic_conv_kernel(x_ref, w_ref, b_ref, o_ref, col_ref, *,
                       K, stride, Ws, Mp, Cin, Cout, negative_slope):
    """One batch element.

    x_ref:   (1, stride*stride*Cin, L)  flattened stride-phase planes (padded)
    w_ref:   (Cout, K*K*Cin)            BN-scale-folded weights, im2col order
    b_ref:   (Cout, 1)                  folded BN bias (f32)
    o_ref:   (1, Cout, Mp)              Mp = round_up(Ho*Ws, 128), lane-dense
    col_ref: (K*K*Cin, Mp)              VMEM im2col scratch (matmul dtype)
    """
    xf = x_ref[0]                                      # (s*s*Cin, L)
    s = stride

    # Build the im2col matrix: each of the K*K taps is one contiguous,
    # unit-stride lane slice of its stride-phase plane (valid for any stride),
    # copied into the scratch exactly once.
    for kh in range(K):
        for kw in range(K):
            t = kh * K + kw
            ph, qh = kh % s, kh // s
            pw, qw = kw % s, kw // s
            phase = ph * s + pw
            off = qh * Ws + qw
            col_ref[t * Cin:(t + 1) * Cin, :] = \
                xf[phase * Cin:(phase + 1) * Cin, off:off + Mp]

    # Single full-depth MXU contraction (k = K*K*Cin), f32 accumulation.
    acc = jax.lax.dot_general(
        w_ref[...], col_ref[...],
        dimension_numbers=(((1,), (0,)), ((), ())),
        preferred_element_type=jnp.float32)            # (Cout, Mp)

    # Epilogue: folded BN bias + LeakyReLU(0.1), lane-dense, f32.
    y = acc + b_ref[...]                               # (Cout, 1) broadcast
    y = jnp.where(y > 0, y, negative_slope * y)
    o_ref[0] = y.astype(o_ref.dtype)


def basic_conv(x_nchw, weight_oihw, gamma, beta, running_mean, running_var, *,
               stride=1, eps=1e-5, negative_slope=0.1,
               matmul_dtype=jnp.bfloat16):
    """Forward pass of BasicConv. x_nchw: (N, Cin, H, W) float32."""
    N, Cin, H, W = x_nchw.shape
    Cout, _, K, _ = weight_oihw.shape
    pad = K // 2
    s = stride
    Ho = (H + 2 * pad - K) // s + 1
    Wo = (W + 2 * pad - K) // s + 1
    q = (K - 1) // s              # max per-phase tap offset (rows and cols)
    Hs, Ws = Ho + q, Wo + q       # per-phase plane extent used by the kernel
    M = Ho * Ws                   # valid flat output width per image
    Mp = _round_up(M, 128)        # lane-multiple width -> unmasked stores

    # ---- glue: BN fold + layout plumbing (plain JAX on tiny tensors) ----
    scale = gamma / jnp.sqrt(running_var + eps)                    # (Cout,)
    w_folded = weight_oihw * scale[:, None, None, None]            # fold scale
    # im2col row order is (kh, kw, cin): weights -> (Cout, K*K*Cin)
    w_gemm = jnp.transpose(w_folded, (0, 2, 3, 1)).reshape(Cout, K * K * Cin)
    w_gemm = w_gemm.astype(matmul_dtype)
    b_k = (beta - running_mean * scale).reshape(Cout, 1).astype(jnp.float32)

    # "same" conv padding + enough extra so every stride-phase plane has a
    # full (Hs, Ws) extent; split into phase planes and flatten so every
    # in-kernel tap read is a contiguous lane slice.
    Hp, Wp = H + 2 * pad, W + 2 * pad
    extra_h = max(0, (s - 1) + (Hs - 1) * s + 1 - Hp)
    extra_w = max(0, (s - 1) + (Ws - 1) * s + 1 - Wp)
    xp = jnp.pad(x_nchw, ((0, 0), (0, 0),
                          (pad, pad + extra_h), (pad, pad + extra_w)))
    planes = [xp[:, :, ph::s, pw::s][:, :, :Hs, :Ws]
              for ph in range(s) for pw in range(s)]
    xph = jnp.stack(planes, axis=1)                    # (N, s*s, Cin, Hs, Ws)
    # L must cover the largest tap offset plus a full Mp-wide lane slice.
    L = _round_up(q * Ws + q + Mp, 128)
    xf = xph.reshape(N, s * s * Cin, Hs * Ws)
    xf = jnp.pad(xf, ((0, 0), (0, 0), (0, L - Hs * Ws)))
    xf = xf.astype(matmul_dtype)                       # half DMA bytes (bf16)

    kernel = functools.partial(
        _basic_conv_kernel, K=K, stride=s, Ws=Ws, Mp=Mp,
        Cin=Cin, Cout=Cout, negative_slope=negative_slope)

    out_flat = pl.pallas_call(
        kernel,
        out_shape=jax.ShapeDtypeStruct((N, Cout, Mp), x_nchw.dtype),
        grid=(N,),
        in_specs=[
            pl.BlockSpec((1, s * s * Cin, L), lambda n: (n, 0, 0)),
            pl.BlockSpec((Cout, K * K * Cin), lambda n: (0, 0)),
            pl.BlockSpec((Cout, 1), lambda n: (0, 0)),
        ],
        out_specs=pl.BlockSpec((1, Cout, Mp), lambda n: (n, 0, 0)),
        scratch_shapes=[pltpu.VMEM((K * K * Cin, Mp), matmul_dtype)],
        compiler_params=pltpu.CompilerParams(
            dimension_semantics=("parallel",)),       # batch across TCs (v7x)
    )(xf, w_gemm, b_k)

    # Lane-dense slab -> NCHW: slice valid width, reshape, drop wrapped cols.
    # (keep this slice coupled to the layout above; cols wo in [Wo, Ws) and
    #  lanes m in [M, Mp) intentionally hold garbage/zero values)
    return out_flat[:, :, :M].reshape(N, Cout, Ho, Ws)[:, :, :, :Wo]


def _reference(x_nchw, weight_oihw, gamma, beta, running_mean, running_var, *,
               stride=1, eps=1e-5, negative_slope=0.1):
    pad = weight_oihw.shape[2] // 2
    y = jax.lax.conv_general_dilated(
        x_nchw, weight_oihw, window_strides=(stride, stride),
        padding=((pad, pad), (pad, pad)),
        dimension_numbers=("NCHW", "OIHW", "NCHW"))
    scale = (gamma / jnp.sqrt(running_var + eps)).reshape(1, -1, 1, 1)
    bias = (beta - running_mean * gamma /
            jnp.sqrt(running_var + eps)).reshape(1, -1, 1, 1)
    y = y * scale + bias
    return jnp.where(y > 0, y, negative_slope * y)


def _run_case(key, N, Cin, H, W, Cout, K, stride, matmul_dtype, atol, rtol):
    k_x, k_w, k_g, k_b, k_m, k_v = jax.random.split(key, 6)
    x = jax.random.normal(k_x, (N, Cin, H, W), dtype=jnp.float32)
    weight = jax.random.normal(k_w, (Cout, Cin, K, K), dtype=jnp.float32) * 0.1
    gamma = 1.0 + 0.1 * jax.random.normal(k_g, (Cout,), dtype=jnp.float32)
    beta = 0.1 * jax.random.normal(k_b, (Cout,), dtype=jnp.float32)
    running_mean = 0.1 * jax.random.normal(k_m, (Cout,), dtype=jnp.float32)
    running_var = jnp.abs(jax.random.normal(k_v, (Cout,), dtype=jnp.float32)) + 0.5

    out = basic_conv(x, weight, gamma, beta, running_mean, running_var,
                     stride=stride, matmul_dtype=matmul_dtype)
    out = jax.block_until_ready(out)

    ref = _reference(x, weight, gamma, beta, running_mean, running_var,
                     stride=stride)
    pad = K // 2
    Ho = (H + 2 * pad - K) // stride + 1
    Wo = (W + 2 * pad - K) // stride + 1
    assert out.shape == (N, Cout, Ho, Wo), out.shape
    err = float(jnp.max(jnp.abs(out - ref)))
    assert jnp.allclose(out, ref, atol=atol, rtol=rtol), \
        f"stride={stride} dtype={matmul_dtype} max_abs_err={err}"


if __name__ == "__main__":
    key = jax.random.PRNGKey(0)
    k1, k2, k3 = jax.random.split(key, 3)

    # BasicConv(in_channels=4, out_channels=8, kernel_size=3)
    # 1) stride=1, f32 MXU operands (tight tolerance)
    _run_case(k1, N=2, Cin=4, H=16, W=16, Cout=8, K=3, stride=1,
              matmul_dtype=jnp.float32, atol=1e-4, rtol=1e-4)
    # 2) stride=2, non-square spatial, f32 MXU operands (tight tolerance)
    _run_case(k2, N=2, Cin=4, H=16, W=12, Cout=8, K=3, stride=2,
              matmul_dtype=jnp.float32, atol=1e-4, rtol=1e-4)
    # 3) stride=1, default bf16 MXU operands (loosened tolerance for bf16)
    _run_case(k3, N=2, Cin=4, H=16, W=16, Cout=8, K=3, stride=1,
              matmul_dtype=jnp.bfloat16, atol=5e-2, rtol=5e-2)

    print("KERNEL_OK")
</pallas_src>

<mosaic_0001>
module attributes {stable_mosaic.version = 11 : i64} {
  func.func @_basic_conv_kernel(%arg0: i32, %arg1: memref<1x4x512xf32, #tpu.memory_space<vmem>>, %arg2: memref<8x36xf32, #tpu.memory_space<vmem>>, %arg3: memref<8x1xf32, #tpu.memory_space<vmem>>, %arg4: memref<1x8x384xf32, #tpu.memory_space<vmem>>, %arg5: memref<36x384xf32, #tpu.memory_space<vmem>>) attributes {dimension_semantics = [#tpu.dimension_semantics<parallel>], iteration_bounds = array<i64: 2>, scalar_prefetch = 0 : i64, scratch_operands = 1 : i64, tpu.core_type = #tpu.core_type<tc>, window_params = [{transform_indices = @transform_0, window_bounds = array<i64: 1, 4, 512>}, {pipeline_mode = #tpu.pipeline_mode<synchronous>, transform_indices = @transform_1, window_bounds = array<i64: 8, 36>}, {pipeline_mode = #tpu.pipeline_mode<synchronous>, transform_indices = @transform_2, window_bounds = array<i64: 8, 1>}, {transform_indices = @transform_3, window_bounds = array<i64: 1, 8, 384>}]} {
    %c0 = arith.constant 0 : index
    %c0_0 = arith.constant 0 : index
    %c0_1 = arith.constant 0 : index
    %0 = vector.load %arg1[%c0, %c0_0, %c0_1] : memref<1x4x512xf32, #tpu.memory_space<vmem>>, vector<1x4x512xf32>
    %1 = vector.shape_cast %0 : vector<1x4x512xf32> to vector<4x512xf32>
    %2 = vector.extract_strided_slice %1 {offsets = [0, 0], sizes = [4, 384], strides = [1, 1]} : vector<4x512xf32> to vector<4x384xf32>
    %c0_2 = arith.constant 0 : index
    %c0_3 = arith.constant 0 : index
    %3 = vector.load %arg5[%c0_2, %c0_3] : memref<36x384xf32, #tpu.memory_space<vmem>>, vector<4x384xf32>
    tpu.vector_store %arg5[%c0_2, %c0_3], %2 {strides = array<i32>} : memref<36x384xf32, #tpu.memory_space<vmem>>, vector<4x384xf32>,
    %4 = vector.extract_strided_slice %1 {offsets = [0, 1], sizes = [4, 384], strides = [1, 1]} : vector<4x512xf32> to vector<4x384xf32>
    %c4 = arith.constant 4 : index
    %c0_4 = arith.constant 0 : index
    %5 = vector.load %arg5[%c4, %c0_4] : memref<36x384xf32, #tpu.memory_space<vmem>>, vector<4x384xf32>
    tpu.vector_store %arg5[%c4, %c0_4], %4 {strides = array<i32>} : memref<36x384xf32, #tpu.memory_space<vmem>>, vector<4x384xf32>,
    %6 = vector.extract_strided_slice %1 {offsets = [0, 2], sizes = [4, 384], strides = [1, 1]} : vector<4x512xf32> to vector<4x384xf32>
    %c8 = arith.constant 8 : index
    %c0_5 = arith.constant 0 : index
    %7 = vector.load %arg5[%c8, %c0_5] : memref<36x384xf32, #tpu.memory_space<vmem>>, vector<4x384xf32>
    tpu.vector_store %arg5[%c8, %c0_5], %6 {strides = array<i32>} : memref<36x384xf32, #tpu.memory_space<vmem>>, vector<4x384xf32>,
    %8 = vector.extract_strided_slice %1 {offsets = [0, 18], sizes = [4, 384], strides = [1, 1]} : vector<4x512xf32> to vector<4x384xf32>
    %c12 = arith.constant 12 : index
    %c0_6 = arith.constant 0 : index
    %9 = vector.load %arg5[%c12, %c0_6] : memref<36x384xf32, #tpu.memory_space<vmem>>, vector<4x384xf32>
    tpu.vector_store %arg5[%c12, %c0_6], %8 {strides = array<i32>} : memref<36x384xf32, #tpu.memory_space<vmem>>, vector<4x384xf32>,
    %10 = vector.extract_strided_slice %1 {offsets = [0, 19], sizes = [4, 384], strides = [1, 1]} : vector<4x512xf32> to vector<4x384xf32>
    %c16 = arith.constant 16 : index
    %c0_7 = arith.constant 0 : index
    %11 = vector.load %arg5[%c16, %c0_7] : memref<36x384xf32, #tpu.memory_space<vmem>>, vector<4x384xf32>
    tpu.vector_store %arg5[%c16, %c0_7], %10 {strides = array<i32>} : memref<36x384xf32, #tpu.memory_space<vmem>>, vector<4x384xf32>,
    %12 = vector.extract_strided_slice %1 {offsets = [0, 20], sizes = [4, 384], strides = [1, 1]} : vector<4x512xf32> to vector<4x384xf32>
    %c20 = arith.constant 20 : index
    %c0_8 = arith.constant 0 : index
    %13 = vector.load %arg5[%c20, %c0_8] : memref<36x384xf32, #tpu.memory_space<vmem>>, vector<4x384xf32>
    tpu.vector_store %arg5[%c20, %c0_8], %12 {strides = array<i32>} : memref<36x384xf32, #tpu.memory_space<vmem>>, vector<4x384xf32>,
    %14 = vector.extract_strided_slice %1 {offsets = [0, 36], sizes = [4, 384], strides = [1, 1]} : vector<4x512xf32> to vector<4x384xf32>
    %c24 = arith.constant 24 : index
    %c0_9 = arith.constant 0 : index
    %15 = vector.load %arg5[%c24, %c0_9] : memref<36x384xf32, #tpu.memory_space<vmem>>, vector<4x384xf32>
    tpu.vector_store %arg5[%c24, %c0_9], %14 {strides = array<i32>} : memref<36x384xf32, #tpu.memory_space<vmem>>, vector<4x384xf32>,
    %16 = vector.extract_strided_slice %1 {offsets = [0, 37], sizes = [4, 384], strides = [1, 1]} : vector<4x512xf32> to vector<4x384xf32>
    %c28 = arith.constant 28 : index
    %c0_10 = arith.constant 0 : index
    %17 = vector.load %arg5[%c28, %c0_10] : memref<36x384xf32, #tpu.memory_space<vmem>>, vector<4x384xf32>
    tpu.vector_store %arg5[%c28, %c0_10], %16 {strides = array<i32>} : memref<36x384xf32, #tpu.memory_space<vmem>>, vector<4x384xf32>,
    %18 = vector.extract_strided_slice %1 {offsets = [0, 38], sizes = [4, 384], strides = [1, 1]} : vector<4x512xf32> to vector<4x384xf32>
    %c32 = arith.constant 32 : index
    %c0_11 = arith.constant 0 : index
    %19 = vector.load %arg5[%c32, %c0_11] : memref<36x384xf32, #tpu.memory_space<vmem>>, vector<4x384xf32>
    tpu.vector_store %arg5[%c32, %c0_11], %18 {strides = array<i32>} : memref<36x384xf32, #tpu.memory_space<vmem>>, vector<4x384xf32>,
    %c0_12 = arith.constant 0 : index
    %c0_13 = arith.constant 0 : index
    %20 = vector.load %arg2[%c0_12, %c0_13] : memref<8x36xf32, #tpu.memory_space<vmem>>, vector<8x36xf32>
    %c0_14 = arith.constant 0 : index
    %c0_15 = arith.constant 0 : index
    %21 = vector.load %arg5[%c0_14, %c0_15] : memref<36x384xf32, #tpu.memory_space<vmem>>, vector<36x384xf32>
    %cst = arith.constant dense<0.000000e+00> : vector<8x384xf32>
    %22 = tpu.matmul %20, %21, %cst {dimension_numbers = #tpu.dot_dimension_numbers<[1], [0], [0], [1], [0, 0, 1, 1], [], []>} : vector<8x36xf32>, vector<36x384xf32>, vector<8x384xf32> -> vector<8x384xf32>
    %c0_16 = arith.constant 0 : index
    %c0_17 = arith.constant 0 : index
    %23 = vector.load %arg3[%c0_16, %c0_17] : memref<8x1xf32, #tpu.memory_space<vmem>>, vector<8x1xf32>
    %24 = vector.broadcast %23 : vector<8x1xf32> to vector<8x384xf32>
    %25 = arith.addf %22, %24 : vector<8x384xf32>
    %cst_18 = arith.constant 0.000000e+00 : f32
    %26 = vector.broadcast %cst_18 : f32 to vector<8x384xf32>
    %27 = arith.cmpf ogt, %25, %26 : vector<8x384xf32>
    %cst_19 = arith.constant 1.000000e-01 : f32
    %28 = vector.broadcast %cst_19 : f32 to vector<8x384xf32>
    %29 = arith.mulf %28, %25 : vector<8x384xf32>
    %30 = arith.select %27, %25, %29 : vector<8x384xi1>, vector<8x384xf32>
    %c0_20 = arith.constant 0 : index
    %c0_21 = arith.constant 0 : index
    %c0_22 = arith.constant 0 : index
    %31 = vector.load %arg4[%c0_20, %c0_21, %c0_22] : memref<1x8x384xf32, #tpu.memory_space<vmem>>, vector<1x8x384xf32>
    %32 = vector.shape_cast %31 : vector<1x8x384xf32> to vector<8x384xf32>
    %33 = vector.shape_cast %30 : vector<8x384xf32> to vector<1x8x384xf32>
    tpu.vector_store %arg4[%c0_20, %c0_21, %c0_22], %33 {strides = array<i32>} : memref<1x8x384xf32, #tpu.memory_space<vmem>>, vector<1x8x384xf32>,
    return
  }
  func.func @transform_0(%arg0: i32) -> (i32, i32, i32) {
    %c0_i32 = arith.constant 0 : i32
    %c0_i32_0 = arith.constant 0 : i32
    %c0_i32_1 = arith.constant 0 : i32
    return %arg0, %c0_i32, %c0_i32_0 : i32, i32, i32
  }
  func.func @transform_1(%arg0: i32) -> (i32, i32) {
    %c0_i32 = arith.constant 0 : i32
    %c0_i32_0 = arith.constant 0 : i32
    %c0_i32_1 = arith.constant 0 : i32
    return %c0_i32, %c0_i32_0 : i32, i32
  }
  func.func @transform_2(%arg0: i32) -> (i32, i32) {
    %c0_i32 = arith.constant 0 : i32
    %c0_i32_0 = arith.constant 0 : i32
    %c0_i32_1 = arith.constant 0 : i32
    return %c0_i32, %c0_i32_0 : i32, i32
  }
  func.func @transform_3(%arg0: i32) -> (i32, i32, i32) {
    %c0_i32 = arith.constant 0 : i32
    %c0_i32_0 = arith.constant 0 : i32
    %c0_i32_1 = arith.constant 0 : i32
    return %arg0, %c0_i32, %c0_i32_0 : i32, i32, i32
  }
}

</mosaic_0001>

<llo_original>
// kernel: tpu_custom_call.1
$region0: #{tpu_custom_call.1}
  #allocation0 [shape = 'u32[]', space=smem, size = 0x4, offset = 0x4, fixed_abs, tag = 'smem constant byte address 0x4 - core index']
  #allocation1 [shape = 'u32[144,128]{1,0:T(1,128)}', space=vmem, size = 0x12000, scoped, tag = 'internal scratch']
  #allocation2 [shape = 'f32[36,384]{1,0:T(8,128)}', space=vmem, size = 0xf000, scoped, tag = 'scratch operand']
  %s0 = inlined_call_operand.hbm [shape: f32[2,4,512], index: 0, kind: input, shape index: {}]
  %s1 = inlined_call_operand.vmem [shape: f32[8,36], index: 1, kind: input, shape index: {}]
  %s2 = inlined_call_operand.vmem [shape: f32[8,1], index: 2, kind: input, shape index: {}]
  %s3 = inlined_call_operand.hbm [shape: f32[2,8,384], index: 3, kind: output, shape index: {}]
  %s4 = sld [smem:[#allocation0]]
  $region49: #{tpu_custom_call.1} parent=0
    _
  %s6 = ssub.s32 1, %s4
  %s7 = scalar_select 0, %s6, %s4
  $region1: #{tpu_custom_call.1} parent=0
    #allocation3 [shape = 'u8[16384]{0}', space=vmem, size = 0x4000, scoped, tag = 'input window, operand 0']
    #allocation4 [shape = 's32[2]{0}', space=sflag, size = 0x8, scoped, tag = 'scoped memory for tpu_custom_call.1']
    #allocation5 [shape = 's32[2]{0}', space=sflag, size = 0x8, scoped, tag = 'scoped memory for tpu_custom_call.1']
    #allocation6 [shape = 'u8[24576]{0}', space=vmem, size = 0x6000, scoped, tag = 'output window, operand 0']
    %8 = vsyncpa [#allocation4], 0
    %s9 = scalar_lea.sflag [#allocation4], 1
    %10 = vsyncpa %s9, 0
    %11 = vsyncpa [#allocation5], 0
    %s12 = scalar_lea.sflag [#allocation5], 1
    %13 = vsyncpa %s12, 0
    loop: start=0, step=1, limit=4
    $region2: #{tpu_custom_call.1} parent=1 // loop_pre_header
      _
    $region3: #{tpu_custom_call.1} parent=1 // loop_header
      %s15 = sphi 0, %s19
      %p16 = scmp.ge.s32.totalorder %s15, 4
      %s25 = sphi 0, %s27
      %s28 = sphi 0, %s25
      %s29 = sphi 0, %s28
      %s45 = sphi 0, %s29
      %s49 = sphi 0, %s49
      %s51 = sphi 0, %s49
      %s52 = sphi 0, %s51
      %s66 = sphi 0, %s52
      %s70 = sphi 0, %s70
      %s72 = sphi 0, %s70
      %s73 = sphi 0, %s72
      %s87 = sphi 0, %s73
      %s93 = sphi 0, %s95
      %s96 = sphi 0, %s93
      %s97 = sphi 0, %s96
      %s113 = sphi 0, %s97
    $region4: #{tpu_custom_call.1} parent=1 // loop_header_branch
      %18 = sbr.rel (%p16) target = $region8
    $region5: #{tpu_custom_call.1} parent=1 // loop_body
      %s20 = ssub.s32 %s15, 1
      %s21 = ssub.s32 %s15, 2
      %s22 = sadd.s32 %s15, 1
      %s23 = ssub.s32 %s15, %s22
      %p24 = scmp.eq.s32.totalorder %s23, 0
      %s26 = sadd.s32 %s25, 1
      %s27 = scalar_select %p24, %s25, %s26
      %p30 = pneg %p24
      %p31 = scmp.eq.s32.totalorder %s15, 1
      %p32 = por %p30, %p31
      %p33 = scmp.ne.s32.totalorder %s25, %s28
      %p34 = scmp.eq.s32.totalorder %s15, 0
      %p35 = por %p33, %p34
      %p36 = scmp.ne.s32.totalorder %s25, %s28
      %p37 = scmp.eq.s32.totalorder %s20, 1
      %p38 = por %p36, %p37
      %p39 = scmp.ne.s32.totalorder %s28, %s29
      %p40 = scmp.eq.s32.totalorder %s20, 0
      %p41 = por %p39, %p40
      %p42 = scmp.ne.s32.totalorder %s28, %s29
      %p43 = scmp.eq.s32.totalorder %s21, 1
      %p44 = por %p42, %p43
      %p46 = scmp.ne.s32.totalorder %s29, %s45
      %p47 = scmp.eq.s32.totalorder %s21, 0
      %p48 = por %p46, %p47
      %s50 = sadd.s32 %s49, 1
      %p53 = scmp.eq.s32.totalorder %s15, 1
      %p54 = scmp.ne.s32.totalorder %s49, %s51
      %p55 = scmp.eq.s32.totalorder %s15, 0
      %p56 = por %p54, %p55
      %p57 = scmp.ne.s32.totalorder %s49, %s51
      %p58 = scmp.eq.s32.totalorder %s20, 1
      %p59 = por %p57, %p58
      %p60 = scmp.ne.s32.totalorder %s51, %s52
      %p61 = scmp.eq.s32.totalorder %s20, 0
      %p62 = por %p60, %p61
      %p63 = scmp.ne.s32.totalorder %s51, %s52
      %p64 = scmp.eq.s32.totalorder %s21, 1
      %p65 = por %p63, %p64
      %p67 = scmp.ne.s32.totalorder %s52, %s66
      %p68 = scmp.eq.s32.totalorder %s21, 0
      %p69 = por %p67, %p68
      %s71 = sadd.s32 %s70, 1
      %p74 = scmp.eq.s32.totalorder %s15, 1
      %p75 = scmp.ne.s32.totalorder %s70, %s72
      %p76 = scmp.eq.s32.totalorder %s15, 0
      %p77 = por %p75, %p76
      %p78 = scmp.ne.s32.totalorder %s70, %s72
      %p79 = scmp.eq.s32.totalorder %s20, 1
      %p80 = por %p78, %p79
      %p81 = scmp.ne.s32.totalorder %s72, %s73
      %p82 = scmp.eq.s32.totalorder %s20, 0
      %p83 = por %p81, %p82
      %p84 = scmp.ne.s32.totalorder %s72, %s73
      %p85 = scmp.eq.s32.totalorder %s21, 1
      %p86 = por %p84, %p85
      %p88 = scmp.ne.s32.totalorder %s73, %s87
      %p89 = scmp.eq.s32.totalorder %s21, 0
      %p90 = por %p88, %p89
      %s91 = ssub.s32 %s15, %s22
      %p92 = scmp.eq.s32.totalorder %s91, 0
      %s94 = sadd.s32 %s93, 1
      %s95 = scalar_select %p92, %s93, %s94
      %p98 = pneg %p92
      %p99 = scmp.eq.s32.totalorder %s15, 1
      %p100 = por %p98, %p99
      %p101 = scmp.ne.s32.totalorder %s93, %s96
      %p102 = scmp.eq.s32.totalorder %s15, 0
      %p103 = por %p101, %p102
      %p104 = scmp.ne.s32.totalorder %s93, %s96
      %p105 = scmp.eq.s32.totalorder %s20, 1
      %p106 = por %p104, %p105
      %p107 = scmp.ne.s32.totalorder %s96, %s97
      %p108 = scmp.eq.s32.totalorder %s20, 0
      %p109 = por %p107, %p108
      %p110 = scmp.ne.s32.totalorder %s96, %s97
      %p111 = scmp.eq.s32.totalorder %s21, 1
      %p112 = por %p110, %p111
      %p114 = scmp.ne.s32.totalorder %s97, %s113
      %p115 = scmp.eq.s32.totalorder %s21, 0
      %p116 = por %p114, %p115
      %p117 = scmp.le.s32.totalorder 1, %s15
      %p118 = scmp.lt.s32.totalorder %s15, 3
      %p119 = pnand %p117, %p118
      %p120 = pneg %p119
      // Predicated region
      $region9: #{tpu_custom_call.1} parent=5 // pred_check
        _
      $region10: #{tpu_custom_call.1} parent=5 // pred_check_branch
        %122 = sbr.rel (%p119) target = $region12
      $region11: #{tpu_custom_call.1} parent=5 // pred_region
        %s123 = ssub.s32 %s15, 1
        // Predicated region
        $region13: #{tpu_custom_call.1} parent=11 // pred_check
          %p124 = pneg %p62
        $region14: #{tpu_custom_call.1} parent=11 // pred_check_branch
          %126 = sbr.rel (%p124) target = $region16
        $region15: #{tpu_custom_call.1} parent=11 // pred_region
          _
        $region16: #{tpu_custom_call.1} parent=11 // pred_fallthru
          _
        // Predicated region
        $region17: #{tpu_custom_call.1} parent=11 // pred_check
          %p127 = pneg %p83
        $region18: #{tpu_custom_call.1} parent=11 // pred_check_branch
          %129 = sbr.rel (%p127) target = $region20
        $region19: #{tpu_custom_call.1} parent=11 // pred_region
          _
        $region20: #{tpu_custom_call.1} parent=11 // pred_fallthru
          _
      $region12: #{tpu_custom_call.1} parent=5 // pred_fallthru
        _
      %p130 = scmp.lt.s32.totalorder %s15, 2
      // Predicated region
      $region21: #{tpu_custom_call.1} parent=5 // pred_check
        %p131 = pneg %p130
      $region22: #{tpu_custom_call.1} parent=5 // pred_check_branch
        %133 = sbr.rel (%p131) target = $region24
      $region23: #{tpu_custom_call.1} parent=5 // pred_region
        // Predicated region
        $region25: #{tpu_custom_call.1} parent=23 // pred_check
          %p134 = pneg %p35
        $region26: #{tpu_custom_call.1} parent=23 // pred_check_branch
          %136 = sbr.rel (%p134) target = $region28
        $region27: #{tpu_custom_call.1} parent=23 // pred_region
          %s137 = sand.u32 %s25, 1
          %s138 = scalar_lea.sflag [#allocation4], %s137
          %s139 = sand.u32 %s25, 1
          %s140 = smul.addr %s139, 16
          %s141 = scalar_lea.vmem [#allocation3], %s140
          %s143 = ssub.s32 256, 256
          %144 = vsyncadd %s138, %s143
          %s145 = smul.addr %s15, 4
          %s146 = smul.addr %s145, 64
          %s147 = scalar_lea.hbm %s0, %s146
          %s149 = sshll.u32 %s141, 4
          %s150 = int_to_ptr.vmem [resolvable:$true] %s149
          %152 = dma.hbm_to_vmem [thread:$0]  %s147, 256, %s150, %s138
        $region28: #{tpu_custom_call.1} parent=23 // pred_fallthru
          _
      $region24: #{tpu_custom_call.1} parent=5 // pred_fallthru
        _
      %p153 = scmp.le.s32.totalorder 1, %s15
      %p154 = scmp.lt.s32.totalorder %s15, 3
      %p155 = pnand %p153, %p154
      %p156 = pneg %p155
      // Predicated region
      $region29: #{tpu_custom_call.1} parent=5 // pred_check
        _
      $region30: #{tpu_custom_call.1} parent=5 // pred_check_branch
        %158 = sbr.rel (%p155) target = $region32
      $region31: #{tpu_custom_call.1} parent=5 // pred_region
        %s159 = ssub.s32 %s15, 1
        %s160 = sand.u32 %s28, 1
        %s161 = scalar_lea.sflag [#allocation4], %s160
        %s162 = sand.u32 %s28, 1
        %s163 = smul.addr %s162, 16
        %s164 = scalar_lea.vmem [#allocation3], %s163
        // Predicated region
        $region33: #{tpu_custom_call.1} parent=31 // pred_check
          %p165 = pneg %p41
        $region34: #{tpu_custom_call.1} parent=31 // pred_check_branch
          %167 = sbr.rel (%p165) target = $region36
        $region35: #{tpu_custom_call.1} parent=31 // pred_region
          %168 = dma.done %s161, 256
        $region36: #{tpu_custom_call.1} parent=31 // pred_fallthru
          _
        %s169 = sand.u32 %s28, 1
        %s170 = scalar_lea.sflag [#allocation4], %s169
        %s171 = sand.u32 %s28, 1
        %s172 = smul.addr %s171, 16
        %s173 = scalar_lea.vmem [#allocation3], %s172
        %p174 = pneg %p41
        %p175 = pneg %p38
        %p176 = pneg %p62
        %p177 = pneg %p59
        %p178 = pneg %p83
        %p179 = pneg %p80
        %p180 = pneg %p109
        %p181 = pneg %p106
        %s182 = sand.u32 %s96, 1
        %s183 = scalar_lea.sflag [#allocation5], %s182
        %s184 = sand.u32 %s96, 1
        %s185 = smul.addr %s184, 24
        %s186 = scalar_lea.vmem [#allocation6], %s185
        %v187 = vld [vmem:[%s164] sm:$0xff]
        %v188 = vld [vmem:[%s164 + $0x8] sm:$0xff]
        %v191 = vcombine.high %v187, %v187
        %193 = vst [vmem:[#allocation2] sm:$0xf] %v187
        %194 = vst [vmem:[#allocation2 + $0x8] sm:$0xf] %v191
        %195 = vst [vmem:[#allocation2 + $0x10] sm:$0xf] %v188
        %v196 = vcombine.low %v187, %v187
        %v197 = vcombine.low %v188, %v188
        %198 = vrot.lane.b32.xlu0 %v196, 127
        %v199 = vpop.permute.xlu0 %198
        %200 = vrot.lane.b32.xlu0 %v187, 127
        %v201 = vpop.permute.xlu0 %200
        %202 = vrot.lane.b32.xlu0 %v197, 127
        %v203 = vpop.permute.xlu0 %202
        %204 = vrot.lane.b32.xlu0 %v188, 127
        %v205 = vpop.permute.xlu0 %204
        %vm206 = vcmask 1039360
        %v207 = vsel %vm206, %v199, %v201
        %v208 = vsel %vm206, %v201, %v203
        %v209 = vsel %vm206, %v203, %v205
        %213 = vst [vmem:[#allocation2] sm:$0xf0] %v207
        %214 = vst [vmem:[#allocation2 + $0x8] sm:$0xf0] %v208
        %215 = vst [vmem:[#allocation2 + $0x10] sm:$0xf0] %v209
        %v216 = vcombine.high %v188, %v188
        %217 = vrot.lane.b32.xlu0 %v187, 126
        %v218 = vpop.permute.xlu0 %217
        %219 = vrot.lane.b32.xlu0 %v191, 126
        %v220 = vpop.permute.xlu0 %219
        %221 = vrot.lane.b32.xlu0 %v188, 126
        %v222 = vpop.permute.xlu0 %221
        %223 = vrot.lane.b32.xlu0 %v216, 126
        %v224 = vpop.permute.xlu0 %223
        %vm225 = vcmask 1031168
        %v226 = vsel %vm225, %v218, %v220
        %v227 = vsel %vm225, %v220, %v222
        %v228 = vsel %vm225, %v222, %v224
        %232 = vst [vmem:[#allocation2 + $0x18] sm:$0xf] %v226
        %233 = vst [vmem:[#allocation2 + $0x20] sm:$0xf] %v227
        %234 = vst [vmem:[#allocation2 + $0x28] sm:$0xf] %v228
        %235 = vrot.lane.b32.xlu0 %v196, 110
        %v236 = vpop.permute.xlu0 %235
        %237 = vrot.lane.b32.xlu0 %v187, 110
        %v238 = vpop.permute.xlu0 %237
        %239 = vrot.lane.b32.xlu0 %v197, 110
        %v240 = vpop.permute.xlu0 %239
        %241 = vrot.lane.b32.xlu0 %v188, 110
        %v242 = vpop.permute.xlu0 %241
        %vm243 = vcmask 900096
        %v244 = vsel %vm243, %v236, %v238
        %v245 = vsel %vm243, %v238, %v240
        %v246 = vsel %vm243, %v240, %v242
        %250 = vst [vmem:[#allocation2 + $0x18] sm:$0xf0] %v244
        %251 = vst [vmem:[#allocation2 + $0x20] sm:$0xf0] %v245
        %252 = vst [vmem:[#allocation2 + $0x28] sm:$0xf0] %v246
        %253 = vrot.lane.b32.xlu0 %v187, 109
        %v254 = vpop.permute.xlu0 %253
        %255 = vrot.lane.b32.xlu0 %v191, 109
        %v256 = vpop.permute.xlu0 %255
        %257 = vrot.lane.b32.xlu0 %v188, 109
        %v258 = vpop.permute.xlu0 %257
        %259 = vrot.lane.b32.xlu0 %v216, 109
        %v260 = vpop.permute.xlu0 %259
        %vm261 = vcmask 891904
        %v262 = vsel %vm261, %v254, %v256
        %v263 = vsel %vm261, %v256, %v258
        %v264 = vsel %vm261, %v258, %v260
        %268 = vst [vmem:[#allocation2 + $0x30] sm:$0xf] %v262
        %269 = vst [vmem:[#allocation2 + $0x38] sm:$0xf] %v263
        %270 = vst [vmem:[#allocation2 + $0x40] sm:$0xf] %v264
        %271 = vrot.lane.b32.xlu0 %v196, 108
        %v272 = vpop.permute.xlu0 %271
        %273 = vrot.lane.b32.xlu0 %v187, 108
        %v274 = vpop.permute.xlu0 %273
        %275 = vrot.lane.b32.xlu0 %v197, 108
        %v276 = vpop.permute.xlu0 %275
        %277 = vrot.lane.b32.xlu0 %v188, 108
        %v278 = vpop.permute.xlu0 %277
        %vm279 = vcmask 883712
        %v280 = vsel %vm279, %v272, %v274
        %v281 = vsel %vm279, %v274, %v276
        %v282 = vsel %vm279, %v276, %v278
        %286 = vst [vmem:[#allocation2 + $0x30] sm:$0xf0] %v280
        %287 = vst [vmem:[#allocation2 + $0x38] sm:$0xf0] %v281
        %288 = vst [vmem:[#allocation2 + $0x40] sm:$0xf0] %v282
        %289 = vrot.lane.b32.xlu0 %v187, 92
        %v290 = vpop.permute.xlu0 %289
        %291 = vrot.lane.b32.xlu0 %v191, 92
        %v292 = vpop.permute.xlu0 %291
        %293 = vrot.lane.b32.xlu0 %v188, 92
        %v294 = vpop.permute.xlu0 %293
        %295 = vrot.lane.b32.xlu0 %v216, 92
        %v296 = vpop.permute.xlu0 %295
        %vm297 = vcmask 752640
        %v298 = vsel %vm297, %v290, %v292
        %v299 = vsel %vm297, %v292, %v294
        %v300 = vsel %vm297, %v294, %v296
        %304 = vst [vmem:[#allocation2 + $0x48] sm:$0xf] %v298
        %305 = vst [vmem:[#allocation2 + $0x50] sm:$0xf] %v299
        %306 = vst [vmem:[#allocation2 + $0x58] sm:$0xf] %v300
        %307 = vrot.lane.b32.xlu0 %v196, 91
        %v308 = vpop.permute.xlu0 %307
        %309 = vrot.lane.b32.xlu0 %v187, 91
        %v310 = vpop.permute.xlu0 %309
        %311 = vrot.lane.b32.xlu0 %v197, 91
        %v312 = vpop.permute.xlu0 %311
        %313 = vrot.lane.b32.xlu0 %v188, 91
        %v314 = vpop.permute.xlu0 %313
        %vm315 = vcmask 744448
        %v316 = vsel %vm315, %v308, %v310
        %v317 = vsel %vm315, %v310, %v312
        %v318 = vsel %vm315, %v312, %v314
        %322 = vst [vmem:[#allocation2 + $0x48] sm:$0xf0] %v316
        %323 = vst [vmem:[#allocation2 + $0x50] sm:$0xf0] %v317
        %324 = vst [vmem:[#allocation2 + $0x58] sm:$0xf0] %v318
        %325 = vrot.lane.b32.xlu0 %v187, 90
        %v326 = vpop.permute.xlu0 %325
        %327 = vrot.lane.b32.xlu0 %v191, 90
        %v328 = vpop.permute.xlu0 %327
        %329 = vrot.lane.b32.xlu0 %v188, 90
        %v330 = vpop.permute.xlu0 %329
        %331 = vrot.lane.b32.xlu0 %v216, 90
        %v332 = vpop.permute.xlu0 %331
        %vm333 = vcmask 736256
        %v334 = vsel %vm333, %v326, %v328
        %v335 = vsel %vm333, %v328, %v330
        %v336 = vsel %vm333, %v330, %v332
        %340 = vst [vmem:[#allocation2 + $0x60] sm:$0xf] %v334
        %341 = vst [vmem:[#allocation2 + $0x68] sm:$0xf] %v335
        %342 = vst [vmem:[#allocation2 + $0x70] sm:$0xf] %v336
        %v343 = vld [vmem:[%s1] sm:$0xff]
        %v344 = vld [vmem:[#allocation2] sm:$0xff]
        %v345 = vld [vmem:[#allocation2 + $0x8] sm:$0xff]
        %v346 = vld [vmem:[#allocation2 + $0x10] sm:$0xff]
        %v347 = vld [vmem:[#allocation2 + $0x18] sm:$0xff]
        %v348 = vld [vmem:[#allocation2 + $0x20] sm:$0xff]
        %v349 = vld [vmem:[#allocation2 + $0x28] sm:$0xff]
        %v350 = vld [vmem:[#allocation2 + $0x30] sm:$0xff]
        %v351 = vld [vmem:[#allocation2 + $0x38] sm:$0xff]
        %v352 = vld [vmem:[#allocation2 + $0x40] sm:$0xff]
        %v353 = vld [vmem:[#allocation2 + $0x48] sm:$0xff]
        %v354 = vld [vmem:[#allocation2 + $0x50] sm:$0xff]
        %v355 = vld [vmem:[#allocation2 + $0x58] sm:$0xff]
        %v356 = vld [vmem:[#allocation2 + $0x60] sm:$0xf]
        %v357 = vld [vmem:[#allocation2 + $0x68] sm:$0xf]
        %v358 = vld [vmem:[#allocation2 + $0x70] sm:$0xf]
        %v359 = vld [vmem:[%s2] sm:$0xff]
        %361 = vset.pattern.permute.xlu0 0
        %362 = vperm.xlu0 %361, %v359
        %v363 = vpop.permute.xlu0 %362
        %vm365 = vcmask 293888
        %v367 = vsel %vm365, %v343, 0
        %vm369 = vcmask 1043456
        %v371 = vsel %vm369, %v356, 0
        %v374 = vsel %vm369, %v357, 0
        %v377 = vsel %vm369, %v358, 0
        %379 = vmatprep.subr.mxu0 %v345
        %380 = vmatpush1.msra.mxu0 %v344
        %381 = vmatprep.subr.mxu0 %v348
        %382 = vmatpush1.msra.mxu0 %v347
        %383 = vmatprep.subr.mxu0 %v351
        %384 = vmatpush1.msra.mxu0 %v350
        %385 = vmatprep.subr.mxu0 %v354
        %386 = vmatpush1.msra.mxu0 %v353
        %387 = vmatprep.subr.mxu0 %v374
        %388 = vmatpush1.msra.mxu0 %v371
        %389 = vmatprep.subr.mxu0 0.0
        %390 = vmatpush1.msra.mxu0 0.0
        %391 = vmatprep.subr.mxu0 0.0
        %392 = vmatpush1.msra.mxu0 0.0
        %393 = vmatprep.subr.mxu0 0.0
        %394 = vmatpush1.msra.mxu0 0.0
        %395 = vmatprep.subr.mxu0 0.0
        %396 = vmatpush1.msra.mxu0 0.0
        %397 = vmatprep.subr.mxu0 0.0
        %398 = vmatpush1.msra.mxu0 0.0
        %399 = vmatprep.subr.mxu0 0.0
        %400 = vmatpush1.msra.mxu0 0.0
        %401 = vmatprep.subr.mxu0 0.0
        %402 = vmatpush1.msra.mxu0 0.0
        %403 = vmatprep.subr.mxu0 0.0
        %404 = vmatpush1.msra.mxu0 0.0
        %405 = vmatprep.subr.mxu0 0.0
        %406 = vmatpush1.msra.mxu0 0.0
        %407 = vmatprep.subr.mxu0 0.0
        %408 = vmatpush1.msra.mxu0 0.0
        %409 = vmatprep.subr.mxu0 0.0
        %410 = vmatpush1.msra.mxu0 0.0
        %411 = vmatprep.subr.mxu0 0.0
        %412 = vmatpush1.msra.mxu0 0.0
        %413 = vmatprep.subr.mxu0 0.0
        %414 = vmatpush1.msra.mxu0 0.0
        %415 = vmatprep.subr.mxu0 0.0
        %416 = vmatpush1.msra.mxu0 0.0
        %417 = vmatprep.subr.mxu0 0.0
        %418 = vmatpush1.msra.mxu0 0.0
        %419 = vmatprep.subr.mxu0 0.0
        %420 = vmatpush1.msra.mxu0 0.0
        %421 = vmatprep.subr.mxu0 0.0
        %422 = vmatpush1.msra.mxu0 0.0
        %423 = vmatprep.subr.mxu0 0.0
        %424 = vmatpush1.msra.mxu0 0.0
        %425 = vmatprep.subr.mxu0 0.0
        %426 = vmatpush1.msra.mxu0 0.0
        %427 = vmatprep.subr.mxu0 0.0
        %428 = vmatpush1.msra.mxu0 0.0
        %429 = vmatprep.subr.mxu0 0.0
        %430 = vmatpush1.msra.mxu0 0.0
        %431 = vmatprep.subr.mxu0 0.0
        %432 = vmatpush1.msra.mxu0 0.0
        %433 = vmatprep.subr.mxu0 0.0
        %434 = vmatpush1.msra.mxu0 0.0
        %435 = vmatprep.subr.mxu0 0.0
        %436 = vmatpush1.msra.mxu0 0.0
        %437 = vmatprep.subr.mxu0 0.0
        %438 = vmatpush1.msra.mxu0 0.0
        %439 = vmatprep.subr.mxu0 0.0
        %440 = vmatpush1.msra.mxu0 0.0
        %441 = vmatprep.subr.mxu0 0.0
        %442 = vmatpush1.msra.mxu0 0.0
        %443 = vmatprep.mubr.f32.mxu0 0.0
        %444 = vmatmul.mubr.f32.gmra.mrb[0].mxu0 %v367
        %v445 = vpop.f32.mrb[0].mxu0
        %v446 = vadd.f32 %v363, %v445
        %v447 = vpop.f32.mrb[0].mxu0
        %v448 = vadd.f32 %v363, %v447
        %449 = vdwg.mxu0
        %450 = vmatprep.subr.mxu0 0.0
        %451 = vmatpush1.msra.mxu0 %v346
        %452 = vmatprep.subr.mxu0 0.0
        %453 = vmatpush1.msra.mxu0 %v349
        %454 = vmatprep.subr.mxu0 0.0
        %455 = vmatpush1.msra.mxu0 %v352
        %456 = vmatprep.subr.mxu0 0.0
        %457 = vmatpush1.msra.mxu0 %v355
        %458 = vmatprep.subr.mxu0 0.0
        %459 = vmatpush1.msra.mxu0 %v377
        %460 = vmatprep.subr.mxu0 0.0
        %461 = vmatpush1.msra.mxu0 0.0
        %462 = vmatprep.subr.mxu0 0.0
        %463 = vmatpush1.msra.mxu0 0.0
        %464 = vmatprep.subr.mxu0 0.0
        %465 = vmatpush1.msra.mxu0 0.0
        %466 = vmatprep.subr.mxu0 0.0
        %467 = vmatpush1.msra.mxu0 0.0
        %468 = vmatprep.subr.mxu0 0.0
        %469 = vmatpush1.msra.mxu0 0.0
        %470 = vmatprep.subr.mxu0 0.0
        %471 = vmatpush1.msra.mxu0 0.0
        %472 = vmatprep.subr.mxu0 0.0
        %473 = vmatpush1.msra.mxu0 0.0
        %474 = vmatprep.subr.mxu0 0.0
        %475 = vmatpush1.msra.mxu0 0.0
        %476 = vmatprep.subr.mxu0 0.0
        %477 = vmatpush1.msra.mxu0 0.0
        %478 = vmatprep.subr.mxu0 0.0
        %479 = vmatpush1.msra.mxu0 0.0
        %480 = vmatprep.subr.mxu0 0.0
        %481 = vmatpush1.msra.mxu0 0.0
        %482 = vmatprep.subr.mxu0 0.0
        %483 = vmatpush1.msra.mxu0 0.0
        %484 = vmatprep.subr.mxu0 0.0
        %485 = vmatpush1.msra.mxu0 0.0
        %486 = vmatprep.subr.mxu0 0.0
        %487 = vmatpush1.msra.mxu0 0.0
        %488 = vmatprep.subr.mxu0 0.0
        %489 = vmatpush1.msra.mxu0 0.0
        %490 = vmatprep.subr.mxu0 0.0
        %491 = vmatpush1.msra.mxu0 0.0
        %492 = vmatprep.subr.mxu0 0.0
        %493 = vmatpush1.msra.mxu0 0.0
        %494 = vmatprep.subr.mxu0 0.0
        %495 = vmatpush1.msra.mxu0 0.0
        %496 = vmatprep.subr.mxu0 0.0
        %497 = vmatpush1.msra.mxu0 0.0
        %498 = vmatprep.subr.mxu0 0.0
        %499 = vmatpush1.msra.mxu0 0.0
        %500 = vmatprep.subr.mxu0 0.0
        %501 = vmatpush1.msra.mxu0 0.0
        %502 = vmatprep.subr.mxu0 0.0
        %503 = vmatpush1.msra.mxu0 0.0
        %504 = vmatprep.subr.mxu0 0.0
        %505 = vmatpush1.msra.mxu0 0.0
        %506 = vmatprep.subr.mxu0 0.0
        %507 = vmatpush1.msra.mxu0 0.0
        %508 = vmatprep.subr.mxu0 0.0
        %509 = vmatpush1.msra.mxu0 0.0
        %510 = vmatprep.subr.mxu0 0.0
        %511 = vmatpush1.msra.mxu0 0.0
        %512 = vmatprep.subr.mxu0 0.0
        %513 = vmatpush1.msra.mxu0 0.0
        %514 = vmatprep.mubr.f32.mxu0 0.0
        %515 = vmatmul.mubr.f32.gmra.mrb[0].mxu0 %v367
        %v516 = vpop.f32.mrb[0].mxu0
        %v517 = vadd.f32 %v363, %v516
        %v518 = vpop.f32.mrb[0].mxu0
        %519 = vdwg.mxu0
        %vm520 = vcmp.gt.f32.partialorder %v446, 0.0
        %vm521 = vcmp.gt.f32.partialorder %v448, 0.0
        %vm522 = vcmp.gt.f32.partialorder %v517, 0.0
        %v523 = vmul.f32 %v446, 0.1
        %v524 = vmul.f32 %v448, 0.1
        %v525 = vmul.f32 %v517, 0.1
        %v526 = vsel %vm520, %v446, %v523
        %v527 = vsel %vm521, %v448, %v524
        %v528 = vsel %vm522, %v517, %v525
        %529 = vst [vmem:[%s186] sm:$0xff] %v526
        %530 = vst [vmem:[%s186 + $0x8] sm:$0xff] %v527
        %531 = vst [vmem:[%s186 + $0x10] sm:$0xff] %v528
        %s532 = sand.u32 %s96, 1
        %s533 = scalar_lea.sflag [#allocation5], %s532
        %s534 = sand.u32 %s96, 1
        %s535 = smul.addr %s534, 24
        %s536 = scalar_lea.vmem [#allocation6], %s535
        // Predicated region
        $region37: #{tpu_custom_call.1} parent=31 // pred_check
          %p537 = pneg %p106
        $region38: #{tpu_custom_call.1} parent=31 // pred_check_branch
          %539 = sbr.rel (%p537) target = $region40
        $region39: #{tpu_custom_call.1} parent=31 // pred_region
          %s541 = ssub.s32 384, 384
          %542 = vsyncadd %s533, %s541
          %s543 = smul.addr %s20, 3
          %s544 = smul.addr %s543, 128
          %s545 = scalar_lea.hbm %s3, %s544
          %s547 = sshll.u32 %s536, 4
          %s548 = int_to_ptr.vmem [resolvable:$true] %s547
          %550 = dma.vmem_to_hbm [thread:$0]  %s548, 384, %s545, %s533
        $region40: #{tpu_custom_call.1} parent=31 // pred_fallthru
          _
      $region32: #{tpu_custom_call.1} parent=5 // pred_fallthru
        _
      %p551 = scmp.le.s32.totalorder 2, %s15
      // Predicated region
      $region41: #{tpu_custom_call.1} parent=5 // pred_check
        %p552 = pneg %p551
      $region42: #{tpu_custom_call.1} parent=5 // pred_check_branch
        %554 = sbr.rel (%p552) target = $region44
      $region43: #{tpu_custom_call.1} parent=5 // pred_region
        %s555 = ssub.s32 %s15, 2
        // Predicated region
        $region45: #{tpu_custom_call.1} parent=43 // pred_check
          %p556 = pneg %p112
        $region46: #{tpu_custom_call.1} parent=43 // pred_check_branch
          %558 = sbr.rel (%p556) target = $region48
        $region47: #{tpu_custom_call.1} parent=43 // pred_region
          %s559 = sand.u32 %s97, 1
          %s560 = scalar_lea.sflag [#allocation5], %s559
          %s561 = sand.u32 %s97, 1
          %s562 = smul.addr %s561, 24
          %s563 = scalar_lea.vmem [#allocation6], %s562
          %564 = dma.done %s560, 384
        $region48: #{tpu_custom_call.1} parent=43 // pred_fallthru
          _
      $region44: #{tpu_custom_call.1} parent=5 // pred_fallthru
        _
    $region6: #{tpu_custom_call.1} parent=1 // loop_footer
      %s19 = sadd.s32 1, %s15
    $region7: #{tpu_custom_call.1} parent=1 // loop_footer_branch
      %14 = sbr.rel target = $region3
    $region8: #{tpu_custom_call.1} parent=1 // loop_exit
      _
    %565 = vsyncpa [#allocation4], 1
    %s566 = scalar_lea.sflag [#allocation4], 1
    %567 = vsyncpa %s566, 1
    %568 = vsyncpa [#allocation5], 1
    %s569 = scalar_lea.sflag [#allocation5], 1
    %570 = vsyncpa %s569, 1

</llo_original>
